<compile_context>
chip_gen: v7x
topology: tpu7x:2x2x1
jax: 0.10.0
libtpu: 0.0.40
codegen_flags: <defaults>
</compile_context>

<pallas_src>
import functools

import jax
import jax.numpy as jnp
from jax.experimental import pallas as pl
from jax.experimental.pallas import tpu as pltpu


def _round_up(x, m):
    return (x + m - 1) // m * m


def gat_tile_kernel(s_src_ref, s_dst_ref, adj_ref, h_ref, o_ref, acc_ref,
                    *, alpha, concat, f_out):
    """One (row-tile, key-tile) grid step.

    s_src_ref : (TM, 1)      f32   per-row half of the attention score
    s_dst_ref : (1, TK)      f32   per-column half of the attention score
    adj_ref   : (TM, TK)     int8  0/1 edge mask tile
    h_ref     : (TK, F_PAD)  f32   [h | ones | zero-pad]  (value tile)
    o_ref     : (TM, F_PAD)  f32   padded output row tile (resident across k)
    acc_ref   : (TM, F_PAD)  f32   VMEM accumulator (numerator + fused rowsum)
    """
    k = pl.program_id(1)

    @pl.when(k == 0)
    def _init():
        acc_ref[...] = jnp.zeros_like(acc_ref)

    # scores[i,j] = s_src[i] + s_dst[j]   (VPU broadcast add)
    scores = s_src_ref[...] + s_dst_ref[...]                        # (TM, TK)
    lrelu = jnp.where(scores > 0, scores, alpha * scores)
    # where-mask (NOT multiply): non-edges are exactly 0 even if exp overflows.
    e = jnp.where(adj_ref[...] != 0, jnp.exp(-lrelu), 0.0)          # (TM, TK) f32

    # Single MXU matmul per tile: numerator (cols < f_out) and rowsum
    # (col f_out, via the ones column of h_aug) accumulated together.
    acc_ref[...] += jnp.dot(e, h_ref[...], preferred_element_type=jnp.float32)

    @pl.when(k == pl.num_programs(1) - 1)
    def _finalize():
        acc = acc_ref[...]                                          # (TM, F_PAD)
        rowsum = acc[:, f_out:f_out + 1]                            # (TM, 1)
        rowsum = jnp.where(rowsum == 0.0, 1.0, rowsum)              # e_rowsum[e_rowsum==0]=1
        hp = acc / rowsum
        if concat:
            # ELU (default alpha = 1.0); padded columns stay 0.
            hp = jnp.where(hp > 0, hp, jnp.exp(hp) - 1.0)
        o_ref[...] = hp.astype(o_ref.dtype)


def graph_attention_layer(x, adj_mask, W, a, *, alpha=0.2, concat=True,
                          tm=256, tk=512):
    """x:(N,Fin) f32, adj_mask:(N,N) 0/1, W:(Fin,Fout), a:(1,2*Fout)."""
    N, _ = x.shape
    f_out = W.shape[1]
    f_pad = _round_up(f_out + 1, 128)        # lane-dense: numerator + ones col

    # --- Prologue (hoisted out of the tiled hot loop; tiny K=Fin matmuls) ---
    h = jnp.dot(x, W, preferred_element_type=jnp.float32)               # (N, Fout)
    s_src = jnp.dot(h, a[0, :f_out].reshape(f_out, 1),
                    preferred_element_type=jnp.float32)                 # (N, 1)
    s_dst = jnp.dot(h, a[0, f_out:].reshape(f_out, 1),
                    preferred_element_type=jnp.float32).reshape(1, N)   # (1, N)

    # --- Tile / pad bookkeeping ---
    tm = min(tm, _round_up(N, 128))          # rows per tile   (mult of 32 for int8)
    tk = min(tk, _round_up(N, 128))          # keys per tile   (mult of 128)
    n_rows = _round_up(N, tm)
    n_cols = _round_up(N, tk)

    # adj as int8: 4x less HBM traffic on the dominant stream; padded cols = 0.
    adj_i8 = jnp.zeros((n_rows, n_cols), jnp.int8)
    adj_i8 = adj_i8.at[:N, :N].set(adj_mask.astype(jnp.int8))
    s_src_p = jnp.zeros((n_rows, 1), jnp.float32).at[:N, :].set(s_src)
    s_dst_p = jnp.zeros((1, n_cols), jnp.float32).at[:, :N].set(s_dst)
    # h_aug = [h | ones | zero-pad] -> e @ h_aug fuses rowsum into the matmul.
    h_aug = jnp.zeros((n_cols, f_pad), jnp.float32)
    h_aug = h_aug.at[:N, :f_out].set(h).at[:N, f_out].set(1.0)

    grid = (n_rows // tm, n_cols // tk)
    kern = functools.partial(gat_tile_kernel, alpha=alpha, concat=concat,
                             f_out=f_out)

    out_padded = pl.pallas_call(
        kern,
        out_shape=jax.ShapeDtypeStruct((n_rows, f_pad), jnp.float32),
        grid_spec=pltpu.PrefetchScalarGridSpec(
            num_scalar_prefetch=0,
            grid=grid,
            in_specs=[
                pl.BlockSpec((tm, 1), lambda i, k: (i, 0)),       # s_src
                pl.BlockSpec((1, tk), lambda i, k: (0, k)),       # s_dst
                pl.BlockSpec((tm, tk), lambda i, k: (i, k)),      # adj (int8)
                pl.BlockSpec((tk, f_pad), lambda i, k: (k, 0)),   # h_aug
            ],
            out_specs=pl.BlockSpec((tm, f_pad), lambda i, k: (i, 0)),
            scratch_shapes=[pltpu.VMEM((tm, f_pad), jnp.float32)],
        ),
        compiler_params=pltpu.CompilerParams(
            dimension_semantics=("parallel", "arbitrary")),
    )(s_src_p, s_dst_p, adj_i8, h_aug)

    return out_padded[:N, :f_out]


def reference(x, adj_mask, W, a, *, alpha=0.2, concat=True):
    f_out = W.shape[1]
    h = x @ W
    s_src = h @ a[0, :f_out]
    s_dst = h @ a[0, f_out:]
    scores = s_src[:, None] + s_dst[None, :]
    lrelu = jnp.where(scores > 0, scores, alpha * scores)
    e = jnp.where(adj_mask != 0, jnp.exp(-lrelu), 0.0)
    rowsum = e.sum(axis=1, keepdims=True)
    rowsum = jnp.where(rowsum == 0.0, 1.0, rowsum)
    h_prime = (e @ h) / rowsum
    if concat:
        h_prime = jnp.where(h_prime > 0, h_prime, jnp.exp(h_prime) - 1.0)
    return h_prime


if __name__ == "__main__":
    key = jax.random.PRNGKey(0)
    k_x, k_w, k_a, k_adj = jax.random.split(key, 4)

    N = 512            # number of nodes (adj is N x N)
    in_features = 16
    out_features = 32
    alpha = 0.2
    concat = True

    # node features
    x = jax.random.normal(k_x, (N, in_features), dtype=jnp.float32)

    # xavier_normal_ with gain=1.414
    def xavier_normal(k, shape, gain=1.414):
        fan_in, fan_out = shape[-2], shape[-1]
        std = gain * (2.0 / (fan_in + fan_out)) ** 0.5
        return std * jax.random.normal(k, shape, dtype=jnp.float32)

    W = xavier_normal(k_w, (in_features, out_features))
    a = xavier_normal(k_a, (1, 2 * out_features))

    # deterministic sparse adjacency (dense 0/1 mask), with self-loops
    adj = (jax.random.uniform(k_adj, (N, N)) < 0.05).astype(jnp.float32)
    adj = jnp.maximum(adj, jnp.eye(N, dtype=jnp.float32))

    # small tiles here so the demo exercises a real (4 x 2) grid with
    # accumulation; defaults (tm=256, tk=512) are the production setting.
    gat = jax.jit(functools.partial(graph_attention_layer,
                                    alpha=alpha, concat=concat, tm=128, tk=256))
    out = gat(x, adj, W, a)
    out = jax.block_until_ready(out)

    ref = reference(x, adj, W, a, alpha=alpha, concat=concat)
    assert out.shape == (N, out_features)
    assert bool(jnp.all(jnp.isfinite(out)))
    assert jnp.allclose(out, ref, atol=1e-4, rtol=1e-4), \
        float(jnp.max(jnp.abs(out - ref)))

    print("KERNEL_OK")
</pallas_src>

<mosaic_0001>
module attributes {stable_mosaic.version = 11 : i64} {
  func.func @gat_tile_kernel(%arg0: i32, %arg1: i32, %arg2: memref<128x1xf32, #tpu.memory_space<vmem>>, %arg3: memref<1x256xf32, #tpu.memory_space<vmem>>, %arg4: memref<128x256xi8, #tpu.memory_space<vmem>>, %arg5: memref<256x128xf32, #tpu.memory_space<vmem>>, %arg6: memref<128x128xf32, #tpu.memory_space<vmem>>, %arg7: memref<128x128xf32, #tpu.memory_space<vmem>>) attributes {dimension_semantics = [#tpu.dimension_semantics<parallel>, #tpu.dimension_semantics<arbitrary>], iteration_bounds = array<i64: 4, 2>, scalar_prefetch = 0 : i64, scratch_operands = 1 : i64, tpu.core_type = #tpu.core_type<tc>, window_params = [{transform_indices = @transform_0, window_bounds = array<i64: 128, 1>}, {transform_indices = @transform_1, window_bounds = array<i64: 1, 256>}, {transform_indices = @transform_2, window_bounds = array<i64: 128, 256>}, {transform_indices = @transform_3, window_bounds = array<i64: 256, 128>}, {transform_indices = @transform_4, window_bounds = array<i64: 128, 128>}]} {
    %c0_i32 = arith.constant 0 : i32
    %0 = arith.cmpi eq, %arg1, %c0_i32 : i32
    %1 = arith.extui %0 : i1 to i32
    %c0_i32_0 = arith.constant 0 : i32
    %2 = arith.cmpi ne, %1, %c0_i32_0 : i32
    scf.if %2 {
      %cst_17 = arith.constant 0.000000e+00 : f32
      %29 = vector.broadcast %cst_17 : f32 to vector<128x128xf32>
      %c0_18 = arith.constant 0 : index
      %c0_19 = arith.constant 0 : index
      %30 = vector.load %arg7[%c0_18, %c0_19] : memref<128x128xf32, #tpu.memory_space<vmem>>, vector<128x128xf32>
      tpu.vector_store %arg7[%c0_18, %c0_19], %29 {strides = array<i32>} : memref<128x128xf32, #tpu.memory_space<vmem>>, vector<128x128xf32>,
    } else {
    }
    %c0 = arith.constant 0 : index
    %c0_1 = arith.constant 0 : index
    %3 = vector.load %arg2[%c0, %c0_1] : memref<128x1xf32, #tpu.memory_space<vmem>>, vector<128x1xf32>
    %c0_2 = arith.constant 0 : index
    %c0_3 = arith.constant 0 : index
    %4 = vector.load %arg3[%c0_2, %c0_3] : memref<1x256xf32, #tpu.memory_space<vmem>>, vector<1x256xf32>
    %5 = vector.broadcast %3 : vector<128x1xf32> to vector<128x256xf32>
    %6 = vector.broadcast %4 : vector<1x256xf32> to vector<128x256xf32>
    %7 = arith.addf %5, %6 : vector<128x256xf32>
    %cst = arith.constant 0.000000e+00 : f32
    %8 = vector.broadcast %cst : f32 to vector<128x256xf32>
    %9 = arith.cmpf ogt, %7, %8 : vector<128x256xf32>
    %cst_4 = arith.constant 2.000000e-01 : f32
    %10 = vector.broadcast %cst_4 : f32 to vector<128x256xf32>
    %11 = arith.mulf %10, %7 : vector<128x256xf32>
    %12 = arith.select %9, %7, %11 : vector<128x256xi1>, vector<128x256xf32>
    %c0_5 = arith.constant 0 : index
    %c0_6 = arith.constant 0 : index
    %13 = vector.load %arg4[%c0_5, %c0_6] : memref<128x256xi8, #tpu.memory_space<vmem>>, vector<128x256xi8>
    %c0_i8 = arith.constant 0 : i8
    %14 = vector.broadcast %c0_i8 : i8 to vector<128x256xi8>
    %15 = arith.cmpi ne, %13, %14 : vector<128x256xi8>
    %cst_7 = arith.constant 0.000000e+00 : f32
    %16 = vector.broadcast %cst_7 : f32 to vector<128x256xf32>
    %17 = arith.subf %16, %12 : vector<128x256xf32>
    %18 = math.exp %17 : vector<128x256xf32>
    %cst_8 = arith.constant 0.000000e+00 : f32
    %19 = vector.broadcast %cst_8 : f32 to vector<128x256xf32>
    %20 = arith.select %15, %18, %19 : vector<128x256xi1>, vector<128x256xf32>
    %c0_9 = arith.constant 0 : index
    %c0_10 = arith.constant 0 : index
    %21 = vector.load %arg7[%c0_9, %c0_10] : memref<128x128xf32, #tpu.memory_space<vmem>>, vector<128x128xf32>
    %c0_11 = arith.constant 0 : index
    %c0_12 = arith.constant 0 : index
    %22 = vector.load %arg5[%c0_11, %c0_12] : memref<256x128xf32, #tpu.memory_space<vmem>>, vector<256x128xf32>
    %cst_13 = arith.constant dense<0.000000e+00> : vector<128x128xf32>
    %23 = tpu.matmul %20, %22, %cst_13 {dimension_numbers = #tpu.dot_dimension_numbers<[1], [0], [0], [1], [0, 0, 1, 1], [], []>} : vector<128x256xf32>, vector<256x128xf32>, vector<128x128xf32> -> vector<128x128xf32>
    %24 = arith.addf %21, %23 : vector<128x128xf32>
    %c0_14 = arith.constant 0 : index
    %c0_15 = arith.constant 0 : index
    %25 = vector.load %arg7[%c0_14, %c0_15] : memref<128x128xf32, #tpu.memory_space<vmem>>, vector<128x128xf32>
    tpu.vector_store %arg7[%c0_14, %c0_15], %24 {strides = array<i32>} : memref<128x128xf32, #tpu.memory_space<vmem>>, vector<128x128xf32>,
    %c1_i32 = arith.constant 1 : i32
    %26 = arith.cmpi eq, %arg1, %c1_i32 : i32
    %27 = arith.extui %26 : i1 to i32
    %c0_i32_16 = arith.constant 0 : i32
    %28 = arith.cmpi ne, %27, %c0_i32_16 : i32
    scf.if %28 {
      %c0_17 = arith.constant 0 : index
      %c0_18 = arith.constant 0 : index
      %29 = vector.load %arg7[%c0_17, %c0_18] : memref<128x128xf32, #tpu.memory_space<vmem>>, vector<128x128xf32>
      %30 = vector.extract_strided_slice %29 {offsets = [0, 32], sizes = [128, 1], strides = [1, 1]} : vector<128x128xf32> to vector<128x1xf32>
      %cst_19 = arith.constant 0.000000e+00 : f32
      %31 = vector.broadcast %cst_19 : f32 to vector<128x1xf32>
      %32 = arith.cmpf oeq, %30, %31 : vector<128x1xf32>
      %cst_20 = arith.constant 1.000000e+00 : f32
      %33 = vector.broadcast %cst_20 : f32 to vector<128x1xf32>
      %34 = arith.select %32, %33, %30 : vector<128x1xi1>, vector<128x1xf32>
      %35 = vector.broadcast %34 : vector<128x1xf32> to vector<128x128xf32>
      %36 = arith.divf %29, %35 : vector<128x128xf32>
      %cst_21 = arith.constant 0.000000e+00 : f32
      %37 = vector.broadcast %cst_21 : f32 to vector<128x128xf32>
      %38 = arith.cmpf ogt, %36, %37 : vector<128x128xf32>
      %39 = math.exp %36 : vector<128x128xf32>
      %cst_22 = arith.constant 1.000000e+00 : f32
      %40 = vector.broadcast %cst_22 : f32 to vector<128x128xf32>
      %41 = arith.subf %39, %40 : vector<128x128xf32>
      %42 = arith.select %38, %36, %41 : vector<128x128xi1>, vector<128x128xf32>
      %c0_23 = arith.constant 0 : index
      %c0_24 = arith.constant 0 : index
      %43 = vector.load %arg6[%c0_23, %c0_24] : memref<128x128xf32, #tpu.memory_space<vmem>>, vector<128x128xf32>
      tpu.vector_store %arg6[%c0_23, %c0_24], %42 {strides = array<i32>} : memref<128x128xf32, #tpu.memory_space<vmem>>, vector<128x128xf32>,
    } else {
    }
    return
  }
  func.func @transform_0(%arg0: i32, %arg1: i32) -> (i32, i32) {
    %c0_i32 = arith.constant 0 : i32
    %c0_i32_0 = arith.constant 0 : i32
    return %arg0, %c0_i32 : i32, i32
  }
  func.func @transform_1(%arg0: i32, %arg1: i32) -> (i32, i32) {
    %c0_i32 = arith.constant 0 : i32
    %c0_i32_0 = arith.constant 0 : i32
    return %c0_i32, %arg1 : i32, i32
  }
  func.func @transform_2(%arg0: i32, %arg1: i32) -> (i32, i32) {
    %c0_i32 = arith.constant 0 : i32
    return %arg0, %arg1 : i32, i32
  }
  func.func @transform_3(%arg0: i32, %arg1: i32) -> (i32, i32) {
    %c0_i32 = arith.constant 0 : i32
    %c0_i32_0 = arith.constant 0 : i32
    return %arg1, %c0_i32 : i32, i32
  }
  func.func @transform_4(%arg0: i32, %arg1: i32) -> (i32, i32) {
    %c0_i32 = arith.constant 0 : i32
    %c0_i32_0 = arith.constant 0 : i32
    return %arg0, %c0_i32 : i32, i32
  }
}

</mosaic_0001>

<llo_original>
// kernel: graph_attention_layer.1
$region0: #{graph_attention_layer.1}
  #allocation0 [shape = 'u32[]', space=smem, size = 0x4, offset = 0x4, fixed_abs, tag = 'smem constant byte address 0x4 - core index']
  #allocation1 [shape = 'u32[144,128]{1,0:T(1,128)}', space=vmem, size = 0x12000, scoped, tag = 'internal scratch']
  #allocation2 [shape = 'f32[128,128]{1,0:T(8,128)}', space=vmem, size = 0x10000, scoped, tag = 'scratch operand']
  %s0 = inlined_call_operand.vmem [shape: f32[512,1], index: 0, kind: input, shape index: {}]
  %s1 = inlined_call_operand.vmem [shape: f32[1,512], index: 1, kind: input, shape index: {}]
  %s2 = inlined_call_operand.vmem [shape: s8[512,512], index: 2, kind: input, shape index: {}]
  %s3 = inlined_call_operand.vmem [shape: f32[512,128], index: 3, kind: input, shape index: {}]
  %s4 = inlined_call_operand.vmem [shape: f32[512,128], index: 4, kind: output, shape index: {}]
  %s5 = sld [smem:[#allocation0]]
  $region80: #{graph_attention_layer.1} parent=0
    _
  %s7 = ssub.s32 1, %s5
  %s8 = scalar_select 0, %s7, %s5
  $region1: #{graph_attention_layer.1} parent=0
    #allocation3 [shape = 'u8[65536]{0}', space=vmem, size = 0x10000, scoped, tag = 'input window, operand 2']
    loop: start=0, step=1, limit=10
    $region2: #{graph_attention_layer.1} parent=1 // loop_pre_header
      _
    $region3: #{graph_attention_layer.1} parent=1 // loop_header
      %s10 = sphi 0, %s14
      %p11 = scmp.ge.s32.totalorder %s10, 10
      %s17 = sphi 0, %s29
      %s18 = sphi 0, %s25
      %s19 = sphi 0, %s17
      %s20 = sphi 0, %s18
      %s21 = sphi 0, %s19
      %s22 = sphi 0, %s20
      %s32 = sphi 0, %s34
      %s35 = sphi 0, %s32
      %s36 = sphi 0, %s35
      %s52 = sphi 0, %s36
      %s58 = sphi 0, %s60
      %s61 = sphi 0, %s58
      %s62 = sphi 0, %s61
      %s78 = sphi 0, %s62
      %s86 = sphi 0, %s88
      %s89 = sphi 0, %s86
      %s90 = sphi 0, %s89
      %s106 = sphi 0, %s90
      %s112 = sphi 0, %s114
      %s115 = sphi 0, %s112
      %s116 = sphi 0, %s115
      %s132 = sphi 0, %s116
      %s138 = sphi 0, %s140
      %s141 = sphi 0, %s138
      %s142 = sphi 0, %s141
      %s158 = sphi 0, %s142
    $region4: #{graph_attention_layer.1} parent=1 // loop_header_branch
      %13 = sbr.rel (%p11) target = $region8
    $region5: #{graph_attention_layer.1} parent=1 // loop_body
      %s15 = ssub.s32 %s10, 1
      %s16 = ssub.s32 %s10, 2
      %s23 = sadd.s32 1, %s18
      %p24 = scmp.ge.s32.totalorder %s23, 2
      %s25 = scalar_select %p24, 0, %s23
      %s26 = sadd.s32 1, %s17
      %s27 = scalar_select %p24, %s26, %s17
      %p28 = scmp.ge.s32.totalorder %s27, 4
      %s29 = scalar_select %p28, 0, %s27
      %s30 = ssub.s32 %s17, %s29
      %p31 = scmp.eq.s32.totalorder %s30, 0
      %s33 = sadd.s32 %s32, 1
      %s34 = scalar_select %p31, %s32, %s33
      %p37 = pneg %p31
      %p38 = scmp.eq.s32.totalorder %s10, 7
      %p39 = por %p37, %p38
      %p40 = scmp.ne.s32.totalorder %s32, %s35
      %p41 = scmp.eq.s32.totalorder %s10, 0
      %p42 = por %p40, %p41
      %p43 = scmp.ne.s32.totalorder %s32, %s35
      %p44 = scmp.eq.s32.totalorder %s15, 7
      %p45 = por %p43, %p44
      %p46 = scmp.ne.s32.totalorder %s35, %s36
      %p47 = scmp.eq.s32.totalorder %s15, 0
      %p48 = por %p46, %p47
      %p49 = scmp.ne.s32.totalorder %s35, %s36
      %p50 = scmp.eq.s32.totalorder %s16, 7
      %p51 = por %p49, %p50
      %p53 = scmp.ne.s32.totalorder %s36, %s52
      %p54 = scmp.eq.s32.totalorder %s16, 0
      %p55 = por %p53, %p54
      %s56 = ssub.s32 %s18, %s25
      %p57 = scmp.eq.s32.totalorder %s56, 0
      %s59 = sadd.s32 %s58, 1
      %s60 = scalar_select %p57, %s58, %s59
      %p63 = pneg %p57
      %p64 = scmp.eq.s32.totalorder %s10, 7
      %p65 = por %p63, %p64
      %p66 = scmp.ne.s32.totalorder %s58, %s61
      %p67 = scmp.eq.s32.totalorder %s10, 0
      %p68 = por %p66, %p67
      %p69 = scmp.ne.s32.totalorder %s58, %s61
      %p70 = scmp.eq.s32.totalorder %s15, 7
      %p71 = por %p69, %p70
      %p72 = scmp.ne.s32.totalorder %s61, %s62
      %p73 = scmp.eq.s32.totalorder %s15, 0
      %p74 = por %p72, %p73
      %p75 = scmp.ne.s32.totalorder %s61, %s62
      %p76 = scmp.eq.s32.totalorder %s16, 7
      %p77 = por %p75, %p76
      %p79 = scmp.ne.s32.totalorder %s62, %s78
      %p80 = scmp.eq.s32.totalorder %s16, 0
      %p81 = por %p79, %p80
      %s82 = ssub.s32 %s17, %s29
      %s83 = ssub.s32 %s18, %s25
      %s84 = sor.u32 %s82, %s83
      %p85 = scmp.eq.s32.totalorder %s84, 0
      %s87 = sadd.s32 %s86, 1
      %s88 = scalar_select %p85, %s86, %s87
      %p91 = pneg %p85
      %p92 = scmp.eq.s32.totalorder %s10, 7
      %p93 = por %p91, %p92
      %p94 = scmp.ne.s32.totalorder %s86, %s89
      %p95 = scmp.eq.s32.totalorder %s10, 0
      %p96 = por %p94, %p95
      %p97 = scmp.ne.s32.totalorder %s86, %s89
      %p98 = scmp.eq.s32.totalorder %s15, 7
      %p99 = por %p97, %p98
      %p100 = scmp.ne.s32.totalorder %s89, %s90
      %p101 = scmp.eq.s32.totalorder %s15, 0
      %p102 = por %p100, %p101
      %p103 = scmp.ne.s32.totalorder %s89, %s90
      %p104 = scmp.eq.s32.totalorder %s16, 7
      %p105 = por %p103, %p104
      %p107 = scmp.ne.s32.totalorder %s90, %s106
      %p108 = scmp.eq.s32.totalorder %s16, 0
      %p109 = por %p107, %p108
      %s110 = ssub.s32 %s18, %s25
      %p111 = scmp.eq.s32.totalorder %s110, 0
      %s113 = sadd.s32 %s112, 1
      %s114 = scalar_select %p111, %s112, %s113
      %p117 = pneg %p111
      %p118 = scmp.eq.s32.totalorder %s10, 7
      %p119 = por %p117, %p118
      %p120 = scmp.ne.s32.totalorder %s112, %s115
      %p121 = scmp.eq.s32.totalorder %s10, 0
      %p122 = por %p120, %p121
      %p123 = scmp.ne.s32.totalorder %s112, %s115
      %p124 = scmp.eq.s32.totalorder %s15, 7
      %p125 = por %p123, %p124
      %p126 = scmp.ne.s32.totalorder %s115, %s116
      %p127 = scmp.eq.s32.totalorder %s15, 0
      %p128 = por %p126, %p127
      %p129 = scmp.ne.s32.totalorder %s115, %s116
      %p130 = scmp.eq.s32.totalorder %s16, 7
      %p131 = por %p129, %p130
      %p133 = scmp.ne.s32.totalorder %s116, %s132
      %p134 = scmp.eq.s32.totalorder %s16, 0
      %p135 = por %p133, %p134
      %s136 = ssub.s32 %s17, %s29
      %p137 = scmp.eq.s32.totalorder %s136, 0
      %s139 = sadd.s32 %s138, 1
      %s140 = scalar_select %p137, %s138, %s139
      %p143 = pneg %p137
      %p144 = scmp.eq.s32.totalorder %s10, 7
      %p145 = por %p143, %p144
      %p146 = scmp.ne.s32.totalorder %s138, %s141
      %p147 = scmp.eq.s32.totalorder %s10, 0
      %p148 = por %p146, %p147
      %p149 = scmp.ne.s32.totalorder %s138, %s141
      %p150 = scmp.eq.s32.totalorder %s15, 7
      %p151 = por %p149, %p150
      %p152 = scmp.ne.s32.totalorder %s141, %s142
      %p153 = scmp.eq.s32.totalorder %s15, 0
      %p154 = por %p152, %p153
      %p155 = scmp.ne.s32.totalorder %s141, %s142
      %p156 = scmp.eq.s32.totalorder %s16, 7
      %p157 = por %p155, %p156
      %p159 = scmp.ne.s32.totalorder %s142, %s158
      %p160 = scmp.eq.s32.totalorder %s16, 0
      %p161 = por %p159, %p160
      %p162 = scmp.le.s32.totalorder 1, %s10
      %p163 = scmp.lt.s32.totalorder %s10, 9
      %p164 = pnand %p162, %p163
      %p165 = pneg %p164
      // Predicated region
      $region9: #{graph_attention_layer.1} parent=5 // pred_check
        _
      $region10: #{graph_attention_layer.1} parent=5 // pred_check_branch
        %167 = sbr.rel (%p164) target = $region12
      $region11: #{graph_attention_layer.1} parent=5 // pred_region
        %s168 = ssub.s32 %s10, 1
      $region12: #{graph_attention_layer.1} parent=5 // pred_fallthru
        _
      %p169 = scmp.lt.s32.totalorder %s10, 8
      // Predicated region
      $region13: #{graph_attention_layer.1} parent=5 // pred_check
        %p170 = pneg %p169
      $region14: #{graph_attention_layer.1} parent=5 // pred_check_branch
        %172 = sbr.rel (%p170) target = $region16
      $region15: #{graph_attention_layer.1} parent=5 // pred_region
        // Predicated region
        $region17: #{graph_attention_layer.1} parent=15 // pred_check
          %p173 = pneg %p42
        $region18: #{graph_attention_layer.1} parent=15 // pred_check_branch
          %175 = sbr.rel (%p173) target = $region20
        $region19: #{graph_attention_layer.1} parent=15 // pred_region
          %s176 = smul.u32 16, %s17
          %p177 = scmp.lt.s32.totalorder %s176, 63
          %s178 = scalar_select %p177, %s176, 63
          %s179 = smul.addr %s178, 8
          %s180 = scalar_lea.vmem %s0, %s179
          %s181 = smul.u32 16, %s17
        $region20: #{graph_attention_layer.1} parent=15 // pred_fallthru
          _
        // Predicated region
        $region21: #{graph_attention_layer.1} parent=15 // pred_check
          %p182 = pneg %p68
        $region22: #{graph_attention_layer.1} parent=15 // pred_check_branch
          %184 = sbr.rel (%p182) target = $region24
        $region23: #{graph_attention_layer.1} parent=15 // pred_region
          %s185 = smul.u32 2, %s18
          %p186 = scmp.lt.s32.totalorder %s185, 3
          %s187 = scalar_select %p186, %s185, 3
          %s188 = scalar_lea.vmem %s1, %s187
          %s189 = smul.u32 2, %s18
        $region24: #{graph_attention_layer.1} parent=15 // pred_fallthru
          _
        // Predicated region
        $region25: #{graph_attention_layer.1} parent=15 // pred_check
          %p190 = pneg %p96
        $region26: #{graph_attention_layer.1} parent=15 // pred_check_branch
          %192 = sbr.rel (%p190) target = $region28
        $region27: #{graph_attention_layer.1} parent=15 // pred_region
          %s193 = sand.u32 %s86, 1
          %s194 = sand.u32 %s86, 1
          %s195 = smul.addr %s194, 64
          %s196 = scalar_lea.vmem [#allocation3], %s195
          %s197 = smul.u32 4, %s17
          %s198 = smul.u32 2, %s18
          %s199 = smul.addr %s197, 4
          %s200 = sadd.s32 %s198, %s199
          %s201 = smul.addr %s200, 8
          %s202 = scalar_lea.vmem %s2, %s201
          // Predicated region
          $region29: #{graph_attention_layer.1} parent=27 // pred_check
            _
          $region30: #{graph_attention_layer.1} parent=27 // pred_check_branch
            %204 = sbr.rel (0) target = $region32
          $region31: #{graph_attention_layer.1} parent=27 // pred_region
            // Predicated region
            $region33: #{graph_attention_layer.1} parent=31 // pred_check
              _
            $region34: #{graph_attention_layer.1} parent=31 // pred_check_branch
              %206 = sbr.rel (0) target = $region36
            $region35: #{graph_attention_layer.1} parent=31 // pred_region
              loop: start=0, step=1, limit=1
              $region37: #{graph_attention_layer.1} parent=35 // loop_pre_header
                _
              $region38: #{graph_attention_layer.1} parent=35 // loop_header
                %s208 = sphi 0, %s212
                %p209 = scmp.ge.s32.totalorder %s208, 1
                %s213 = sphi %s202, %s202
                %s214 = sphi %s196, %s196
              $region39: #{graph_attention_layer.1} parent=35 // loop_header_branch
                %211 = sbr.rel (%p209) target = $region43
              $region40: #{graph_attention_layer.1} parent=35 // loop_body
                %v215 = vld [vmem:[%s213] sm:$0xff]
                %216 = vst [vmem:[%s214] sm:$0xff] %v215
                %v217 = vld [vmem:[%s213 + $0x8] sm:$0xff]
                %218 = vst [vmem:[%s214 + $0x8] sm:$0xff] %v217
                %v219 = vld [vmem:[%s213 + $0x20] sm:$0xff]
                %220 = vst [vmem:[%s214 + $0x10] sm:$0xff] %v219
                %v221 = vld [vmem:[%s213 + $0x28] sm:$0xff]
                %222 = vst [vmem:[%s214 + $0x18] sm:$0xff] %v221
                %v223 = vld [vmem:[%s213 + $0x40] sm:$0xff]
                %224 = vst [vmem:[%s214 + $0x20] sm:$0xff] %v223
                %v225 = vld [vmem:[%s213 + $0x48] sm:$0xff]
                %226 = vst [vmem:[%s214 + $0x28] sm:$0xff] %v225
                %v227 = vld [vmem:[%s213 + $0x60] sm:$0xff]
                %228 = vst [vmem:[%s214 + $0x30] sm:$0xff] %v227
                %v229 = vld [vmem:[%s213 + $0x68] sm:$0xff]
                %230 = vst [vmem:[%s214 + $0x38] sm:$0xff] %v229
              $region41: #{graph_attention_layer.1} parent=35 // loop_footer
                %s212 = sadd.s32 1, %s208
              $region42: #{graph_attention_layer.1} parent=35 // loop_footer_branch
                %207 = sbr.rel target = $region38
              $region43: #{graph_attention_layer.1} parent=35 // loop_exit
                _
            $region36: #{graph_attention_layer.1} parent=31 // pred_fallthru
              _
            // Predicated region
            $region44: #{graph_attention_layer.1} parent=31 // pred_check
              _
            $region45: #{graph_attention_layer.1} parent=31 // pred_check_branch
              %232 = sbr.rel target = $region47
            $region46: #{graph_attention_layer.1} parent=31 // pred_region
              _
            $region47: #{graph_attention_layer.1} parent=31 // pred_fallthru
              _
          $region32: #{graph_attention_layer.1} parent=27 // pred_fallthru
            _
          %233 = vnop
        $region28: #{graph_attention_layer.1} parent=15 // pred_fallthru
          _
        // Predicated region
        $region48: #{graph_attention_layer.1} parent=15 // pred_check
          %p234 = pneg %p122
        $region49: #{graph_attention_layer.1} parent=15 // pred_check_branch
          %236 = sbr.rel (%p234) target = $region51
        $region50: #{graph_attention_layer.1} parent=15 // pred_region
          %s237 = smul.u32 32, %s18
          %p238 = scmp.lt.s32.totalorder %s237, 63
          %s239 = scalar_select %p238, %s237, 63
          %s240 = smul.addr %s239, 8
          %s241 = scalar_lea.vmem %s3, %s240
          %s242 = smul.u32 32, %s18
        $region51: #{graph_attention_layer.1} parent=15 // pred_fallthru
          _
      $region16: #{graph_attention_layer.1} parent=5 // pred_fallthru
        _
      %p243 = scmp.le.s32.totalorder 1, %s10
      %p244 = scmp.lt.s32.totalorder %s10, 9
      %p245 = pnand %p243, %p244
      %p246 = pneg %p245
      // Predicated region
      $region52: #{graph_attention_layer.1} parent=5 // pred_check
        _
      $region53: #{graph_attention_layer.1} parent=5 // pred_check_branch
        %248 = sbr.rel (%p245) target = $region55
      $region54: #{graph_attention_layer.1} parent=5 // pred_region
        %s249 = ssub.s32 %s10, 1
        %s250 = sand.u32 %s89, 1
        %s251 = sand.u32 %s89, 1
        %s252 = smul.addr %s251, 64
        %s253 = scalar_lea.vmem [#allocation3], %s252
        // Predicated region
        $region56: #{graph_attention_layer.1} parent=54 // pred_check
          %p254 = pneg %p102
        $region57: #{graph_attention_layer.1} parent=54 // pred_check_branch
          %256 = sbr.rel (%p254) target = $region59
        $region58: #{graph_attention_layer.1} parent=54 // pred_region
          _
        $region59: #{graph_attention_layer.1} parent=54 // pred_fallthru
          _
        %s257 = smul.u32 16, %s19
        %p258 = scmp.lt.s32.totalorder %s257, 63
        %s259 = scalar_select %p258, %s257, 63
        %s260 = smul.addr %s259, 8
        %s261 = scalar_lea.vmem %s0, %s260
        %p262 = pneg %p48
        %p263 = pneg %p45
        %s264 = smul.u32 2, %s20
        %p265 = scmp.lt.s32.totalorder %s264, 3
        %s266 = scalar_select %p265, %s264, 3
        %s267 = scalar_lea.vmem %s1, %s266
        %p268 = pneg %p74
        %p269 = pneg %p71
        %s270 = sand.u32 %s89, 1
        %s271 = sand.u32 %s89, 1
        %s272 = smul.addr %s271, 64
        %s273 = scalar_lea.vmem [#allocation3], %s272
        %p274 = pneg %p102
        %p275 = pneg %p99
        %s276 = smul.u32 32, %s20
        %p277 = scmp.lt.s32.totalorder %s276, 63
        %s278 = scalar_select %p277, %s276, 63
        %s279 = smul.addr %s278, 8
        %s280 = scalar_lea.vmem %s3, %s279
        %p281 = pneg %p128
        %p282 = pneg %p125
        %p283 = pneg %p154
        %p284 = pneg %p151
        %s285 = smul.u32 16, %s19
        %p286 = scmp.lt.s32.totalorder %s285, 63
        %s287 = scalar_select %p286, %s285, 63
        %s288 = smul.addr %s287, 8
        %s289 = scalar_lea.vmem %s4, %s288
        %s290 = smul.u32 16, %s19
        %p291 = scmp.lt.s32.totalorder %s290, 63
        %s292 = scalar_select %p291, %s290, 63
        %s293 = smul.addr %s292, 8
        %s294 = scalar_lea.vmem %s0, %s293
        %s295 = smul.u32 16, %s19
        %s296 = smul.u32 2, %s20
        %p297 = scmp.lt.s32.totalorder %s296, 3
        %s298 = scalar_select %p297, %s296, 3
        %s299 = scalar_lea.vmem %s1, %s298
        %s300 = smul.u32 2, %s20
        %s301 = smul.u32 4, %s19
        %s302 = smul.u32 2, %s20
        %s303 = smul.u32 32, %s20
        %p304 = scmp.lt.s32.totalorder %s303, 63
        %s305 = scalar_select %p304, %s303, 63
        %s306 = smul.addr %s305, 8
        %s307 = scalar_lea.vmem %s3, %s306
        %s308 = smul.u32 32, %s20
        %s309 = smul.u32 16, %s19
        %p310 = scmp.lt.s32.totalorder %s309, 63
        %s311 = scalar_select %p310, %s309, 63
        %s312 = smul.addr %s311, 8
        %s313 = scalar_lea.vmem %s4, %s312
        %s314 = smul.u32 16, %s19
        %p317 = scmp.eq.s32.totalorder %s20, 0
        // Predicated region
        $region60: #{graph_attention_layer.1} parent=54 // pred_check
          %p318 = pneg %p317
        $region61: #{graph_attention_layer.1} parent=54 // pred_check_branch
          %320 = sbr.rel (%p318) target = $region63
        $region62: #{graph_attention_layer.1} parent=54 // pred_region
          %321 = vst [vmem:[#allocation2] sm:$0xff] 0.0
          %322 = vst [vmem:[#allocation2 + $0x8] sm:$0xff] 0.0
          %323 = vst [vmem:[#allocation2 + $0x10] sm:$0xff] 0.0
          %324 = vst [vmem:[#allocation2 + $0x18] sm:$0xff] 0.0
          %325 = vst [vmem:[#allocation2 + $0x20] sm:$0xff] 0.0
          %326 = vst [vmem:[#allocation2 + $0x28] sm:$0xff] 0.0
          %327 = vst [vmem:[#allocation2 + $0x30] sm:$0xff] 0.0
          %328 = vst [vmem:[#allocation2 + $0x38] sm:$0xff] 0.0
          %329 = vst [vmem:[#allocation2 + $0x40] sm:$0xff] 0.0
          %330 = vst [vmem:[#allocation2 + $0x48] sm:$0xff] 0.0
          %331 = vst [vmem:[#allocation2 + $0x50] sm:$0xff] 0.0
          %332 = vst [vmem:[#allocation2 + $0x58] sm:$0xff] 0.0
          %333 = vst [vmem:[#allocation2 + $0x60] sm:$0xff] 0.0
          %334 = vst [vmem:[#allocation2 + $0x68] sm:$0xff] 0.0
          %335 = vst [vmem:[#allocation2 + $0x70] sm:$0xff] 0.0
          %336 = vst [vmem:[#allocation2 + $0x78] sm:$0xff] 0.0
        $region63: #{graph_attention_layer.1} parent=54 // pred_fallthru
          _
        %v337 = vld [vmem:[%s294] sm:$0xff]
        %v338 = vld [vmem:[%s294 + $0x8] sm:$0xff]
        %v339 = vld [vmem:[%s294 + $0x10] sm:$0xff]
        %v340 = vld [vmem:[%s294 + $0x18] sm:$0xff]
        %v341 = vld [vmem:[%s294 + $0x20] sm:$0xff]
        %v342 = vld [vmem:[%s294 + $0x28] sm:$0xff]
        %v343 = vld [vmem:[%s294 + $0x30] sm:$0xff]
        %v344 = vld [vmem:[%s294 + $0x38] sm:$0xff]
        %v345 = vld [vmem:[%s294 + $0x40] sm:$0xff]
        %v346 = vld [vmem:[%s294 + $0x48] sm:$0xff]
        %v347 = vld [vmem:[%s294 + $0x50] sm:$0xff]
        %v348 = vld [vmem:[%s294 + $0x58] sm:$0xff]
        %v349 = vld [vmem:[%s294 + $0x60] sm:$0xff]
        %v350 = vld [vmem:[%s294 + $0x68] sm:$0xff]
        %v351 = vld [vmem:[%s294 + $0x70] sm:$0xff]
        %v352 = vld [vmem:[%s294 + $0x78] sm:$0xff]
        %v353 = vld [vmem:[%s299] sm:$0x3]
        %355 = vset.pattern.permute.xlu0 0
        %356 = vperm.xlu0 %355, %v337
        %v357 = vpop.permute.xlu0 %356
        %360 = vset.pattern.permute.xlu0 0
        %361 = vperm.xlu0 %360, %v338
        %v362 = vpop.permute.xlu0 %361
        %365 = vset.pattern.permute.xlu0 0
        %366 = vperm.xlu0 %365, %v339
        %v367 = vpop.permute.xlu0 %366
        %370 = vset.pattern.permute.xlu0 0
        %371 = vperm.xlu0 %370, %v340
        %v372 = vpop.permute.xlu0 %371
        %375 = vset.pattern.permute.xlu0 0
        %376 = vperm.xlu0 %375, %v341
        %v377 = vpop.permute.xlu0 %376
        %380 = vset.pattern.permute.xlu0 0
        %381 = vperm.xlu0 %380, %v342
        %v382 = vpop.permute.xlu0 %381
        %385 = vset.pattern.permute.xlu0 0
        %386 = vperm.xlu0 %385, %v343
        %v387 = vpop.permute.xlu0 %386
        %390 = vset.pattern.permute.xlu0 0
        %391 = vperm.xlu0 %390, %v344
        %v392 = vpop.permute.xlu0 %391
        %395 = vset.pattern.permute.xlu0 0
        %396 = vperm.xlu0 %395, %v345
        %v397 = vpop.permute.xlu0 %396
        %400 = vset.pattern.permute.xlu0 0
        %401 = vperm.xlu0 %400, %v346
        %v402 = vpop.permute.xlu0 %401
        %405 = vset.pattern.permute.xlu0 0
        %406 = vperm.xlu0 %405, %v347
        %v407 = vpop.permute.xlu0 %406
        %410 = vset.pattern.permute.xlu0 0
        %411 = vperm.xlu0 %410, %v348
        %v412 = vpop.permute.xlu0 %411
        %415 = vset.pattern.permute.xlu0 0
        %416 = vperm.xlu0 %415, %v349
        %v417 = vpop.permute.xlu0 %416
        %420 = vset.pattern.permute.xlu0 0
        %421 = vperm.xlu0 %420, %v350
        %v422 = vpop.permute.xlu0 %421
        %425 = vset.pattern.permute.xlu0 0
        %426 = vperm.xlu0 %425, %v351
        %v427 = vpop.permute.xlu0 %426
        %430 = vset.pattern.permute.xlu0 0
        %431 = vperm.xlu0 %430, %v352
        %v432 = vpop.permute.xlu0 %431
        %v435 = vlaneseq
        %v436 = vshrl.u32 %v435, 7
        %v437 = vsub.s32 0, %v436
        %v438 = vrot.slane %v353, %v437
        %v439 = vlaneseq
        %v440 = vshrl.u32 %v439, 7
        %v441 = vsub.s32 1, %v440
        %v442 = vrot.slane %v353, %v441
        %v445 = vadd.f32 %v357, %v438
        %v446 = vadd.f32 %v357, %v442
        %v447 = vadd.f32 %v362, %v438
        %v448 = vadd.f32 %v362, %v442
        %v449 = vadd.f32 %v367, %v438
        %v450 = vadd.f32 %v367, %v442
        %v451 = vadd.f32 %v372, %v438
        %v452 = vadd.f32 %v372, %v442
        %v453 = vadd.f32 %v377, %v438
        %v454 = vadd.f32 %v377, %v442
        %v455 = vadd.f32 %v382, %v438
        %v456 = vadd.f32 %v382, %v442
        %v457 = vadd.f32 %v387, %v438
        %v458 = vadd.f32 %v387, %v442
        %v459 = vadd.f32 %v392, %v438
        %v460 = vadd.f32 %v392, %v442
        %v461 = vadd.f32 %v397, %v438
        %v462 = vadd.f32 %v397, %v442
        %v463 = vadd.f32 %v402, %v438
        %v464 = vadd.f32 %v402, %v442
        %v465 = vadd.f32 %v407, %v438
        %v466 = vadd.f32 %v407, %v442
        %v467 = vadd.f32 %v412, %v438
        %v468 = vadd.f32 %v412, %v442
        %v469 = vadd.f32 %v417, %v438
        %v470 = vadd.f32 %v417, %v442
        %v471 = vadd.f32 %v422, %v438
        %v472 = vadd.f32 %v422, %v442
        %v473 = vadd.f32 %v427, %v438
        %v474 = vadd.f32 %v427, %v442
        %v475 = vadd.f32 %v432, %v438
        %v476 = vadd.f32 %v432, %v442
        %vm477 = vcmp.gt.f32.partialorder %v445, 0.0
        %vm478 = vcmp.gt.f32.partialorder %v446, 0.0
        %vm479 = vcmp.gt.f32.partialorder %v447, 0.0
        %vm480 = vcmp.gt.f32.partialorder %v448, 0.0
        %vm481 = vcmp.gt.f32.partialorder %v449, 0.0
        %vm482 = vcmp.gt.f32.partialorder %v450, 0.0
        %vm483 = vcmp.gt.f32.partialorder %v451, 0.0
        %vm484 = vcmp.gt.f32.partialorder %v452, 0.0
        %vm485 = vcmp.gt.f32.partialorder %v453, 0.0
        %vm486 = vcmp.gt.f32.partialorder %v454, 0.0
        %vm487 = vcmp.gt.f32.partialorder %v455, 0.0
        %vm488 = vcmp.gt.f32.partialorder %v456, 0.0
        %vm489 = vcmp.gt.f32.partialorder %v457, 0.0
        %vm490 = vcmp.gt.f32.partialorder %v458, 0.0
        %vm491 = vcmp.gt.f32.partialorder %v459, 0.0
        %vm492 = vcmp.gt.f32.partialorder %v460, 0.0
        %vm493 = vcmp.gt.f32.partialorder %v461, 0.0
        %vm494 = vcmp.gt.f32.partialorder %v462, 0.0
        %vm495 = vcmp.gt.f32.partialorder %v463, 0.0
        %vm496 = vcmp.gt.f32.partialorder %v464, 0.0
        %vm497 = vcmp.gt.f32.partialorder %v465, 0.0
        %vm498 = vcmp.gt.f32.partialorder %v466, 0.0
        %vm499 = vcmp.gt.f32.partialorder %v467, 0.0
        %vm500 = vcmp.gt.f32.partialorder %v468, 0.0
        %vm501 = vcmp.gt.f32.partialorder %v469, 0.0
        %vm502 = vcmp.gt.f32.partialorder %v470, 0.0
        %vm503 = vcmp.gt.f32.partialorder %v471, 0.0
        %vm504 = vcmp.gt.f32.partialorder %v472, 0.0
        %vm505 = vcmp.gt.f32.partialorder %v473, 0.0
        %vm506 = vcmp.gt.f32.partialorder %v474, 0.0
        %vm507 = vcmp.gt.f32.partialorder %v475, 0.0
        %vm508 = vcmp.gt.f32.partialorder %v476, 0.0
        %v509 = vmul.f32 %v445, 0.2
        %v510 = vmul.f32 %v446, 0.2
        %v511 = vmul.f32 %v447, 0.2
        %v512 = vmul.f32 %v448, 0.2
        %v513 = vmul.f32 %v449, 0.2
        %v514 = vmul.f32 %v450, 0.2
        %v515 = vmul.f32 %v451, 0.2
        %v516 = vmul.f32 %v452, 0.2
        %v517 = vmul.f32 %v453, 0.2
        %v518 = vmul.f32 %v454, 0.2
        %v519 = vmul.f32 %v455, 0.2
        %v520 = vmul.f32 %v456, 0.2
        %v521 = vmul.f32 %v457, 0.2
        %v522 = vmul.f32 %v458, 0.2
        %v523 = vmul.f32 %v459, 0.2
        %v524 = vmul.f32 %v460, 0.2
        %v525 = vmul.f32 %v461, 0.2
        %v526 = vmul.f32 %v462, 0.2
        %v527 = vmul.f32 %v463, 0.2
        %v528 = vmul.f32 %v464, 0.2
        %v529 = vmul.f32 %v465, 0.2
        %v530 = vmul.f32 %v466, 0.2
        %v531 = vmul.f32 %v467, 0.2
        %v532 = vmul.f32 %v468, 0.2
        %v533 = vmul.f32 %v469, 0.2
        %v534 = vmul.f32 %v470, 0.2
        %v535 = vmul.f32 %v471, 0.2
        %v536 = vmul.f32 %v472, 0.2
        %v537 = vmul.f32 %v473, 0.2
        %v538 = vmul.f32 %v474, 0.2
        %v539 = vmul.f32 %v475, 0.2
        %v540 = vmul.f32 %v476, 0.2
        %v541 = vsel %vm477, %v445, %v509
        %v542 = vsel %vm478, %v446, %v510
        %v543 = vsel %vm479, %v447, %v511
        %v544 = vsel %vm480, %v448, %v512
        %v545 = vsel %vm481, %v449, %v513
        %v546 = vsel %vm482, %v450, %v514
        %v547 = vsel %vm483, %v451, %v515
        %v548 = vsel %vm484, %v452, %v516
        %v549 = vsel %vm485, %v453, %v517
        %v550 = vsel %vm486, %v454, %v518
        %v551 = vsel %vm487, %v455, %v519
        %v552 = vsel %vm488, %v456, %v520
        %v553 = vsel %vm489, %v457, %v521
        %v554 = vsel %vm490, %v458, %v522
        %v555 = vsel %vm491, %v459, %v523
        %v556 = vsel %vm492, %v460, %v524
        %v557 = vsel %vm493, %v461, %v525
        %v558 = vsel %vm494, %v462, %v526
        %v559 = vsel %vm495, %v463, %v527
        %v560 = vsel %vm496, %v464, %v528
        %v561 = vsel %vm497, %v465, %v529
        %v562 = vsel %vm498, %v466, %v530
        %v563 = vsel %vm499, %v467, %v531
        %v564 = vsel %vm500, %v468, %v532
        %v565 = vsel %vm501, %v469, %v533
        %v566 = vsel %vm502, %v470, %v534
        %v567 = vsel %vm503, %v471, %v535
        %v568 = vsel %vm504, %v472, %v536
        %v569 = vsel %vm505, %v473, %v537
        %v570 = vsel %vm506, %v474, %v538
        %v571 = vsel %vm507, %v475, %v539
        %v572 = vsel %vm508, %v476, %v540
        %v573 = vld [vmem:[%s253] sm:$0xff]
        %v574 = vld [vmem:[%s253 + $0x8] sm:$0xff]
        %v575 = vld [vmem:[%s253 + $0x10] sm:$0xff]
        %v576 = vld [vmem:[%s253 + $0x18] sm:$0xff]
        %v577 = vld [vmem:[%s253 + $0x20] sm:$0xff]
        %v578 = vld [vmem:[%s253 + $0x28] sm:$0xff]
        %v579 = vld [vmem:[%s253 + $0x30] sm:$0xff]
        %v580 = vld [vmem:[%s253 + $0x38] sm:$0xff]
        %vm581 = vnez %v573
        %vm582 = vnez %v574
        %vm583 = vnez %v575
        %vm584 = vnez %v576
        %vm585 = vnez %v577
        %vm586 = vnez %v578
        %vm587 = vnez %v579
        %vm588 = vnez %v580
        %v589 = vsub.f32 0.0, %v541
        %v590 = vsub.f32 0.0, %v542
        %v591 = vsub.f32 0.0, %v543
        %v592 = vsub.f32 0.0, %v544
        %v593 = vsub.f32 0.0, %v545
        %v594 = vsub.f32 0.0, %v546
        %v595 = vsub.f32 0.0, %v547
        %v596 = vsub.f32 0.0, %v548
        %v597 = vsub.f32 0.0, %v549
        %v598 = vsub.f32 0.0, %v550
        %v599 = vsub.f32 0.0, %v551
        %v600 = vsub.f32 0.0, %v552
        %v601 = vsub.f32 0.0, %v553
        %v602 = vsub.f32 0.0, %v554
        %v603 = vsub.f32 0.0, %v555
        %v604 = vsub.f32 0.0, %v556
        %v605 = vsub.f32 0.0, %v557
        %v606 = vsub.f32 0.0, %v558
        %v607 = vsub.f32 0.0, %v559
        %v608 = vsub.f32 0.0, %v560
        %v609 = vsub.f32 0.0, %v561
        %v610 = vsub.f32 0.0, %v562
        %v611 = vsub.f32 0.0, %v563
        %v612 = vsub.f32 0.0, %v564
        %v613 = vsub.f32 0.0, %v565
        %v614 = vsub.f32 0.0, %v566
        %v615 = vsub.f32 0.0, %v567
        %v616 = vsub.f32 0.0, %v568
        %v617 = vsub.f32 0.0, %v569
        %v618 = vsub.f32 0.0, %v570
        %v619 = vsub.f32 0.0, %v571
        %v620 = vsub.f32 0.0, %v572
        %v621 = vmul.f32 %v589, 1.442695
        %v622 = vpow.pop %v621
        %v623 = vmul.f32 %v590, 1.442695
        %v624 = vpow.pop %v623
        %v625 = vmul.f32 %v591, 1.442695
        %v626 = vpow.pop %v625
        %v627 = vmul.f32 %v592, 1.442695
        %v628 = vpow.pop %v627
        %v629 = vmul.f32 %v593, 1.442695
        %v630 = vpow.pop %v629
        %v631 = vmul.f32 %v594, 1.442695
        %v632 = vpow.pop %v631
        %v633 = vmul.f32 %v595, 1.442695
        %v634 = vpow.pop %v633
        %v635 = vmul.f32 %v596, 1.442695
        %v636 = vpow.pop %v635
        %v637 = vmul.f32 %v597, 1.442695
        %v638 = vpow.pop %v637
        %v639 = vmul.f32 %v598, 1.442695
        %v640 = vpow.pop %v639
        %v641 = vmul.f32 %v599, 1.442695
        %v642 = vpow.pop %v641
        %v643 = vmul.f32 %v600, 1.442695
        %v644 = vpow.pop %v643
        %v645 = vmul.f32 %v601, 1.442695
        %v646 = vpow.pop %v645
        %v647 = vmul.f32 %v602, 1.442695
        %v648 = vpow.pop %v647
        %v649 = vmul.f32 %v603, 1.442695
        %v650 = vpow.pop %v649
        %v651 = vmul.f32 %v604, 1.442695
        %v652 = vpow.pop %v651
        %v653 = vmul.f32 %v605, 1.442695
        %v654 = vpow.pop %v653
        %v655 = vmul.f32 %v606, 1.442695
        %v656 = vpow.pop %v655
        %v657 = vmul.f32 %v607, 1.442695
        %v658 = vpow.pop %v657
        %v659 = vmul.f32 %v608, 1.442695
        %v660 = vpow.pop %v659
        %v661 = vmul.f32 %v609, 1.442695
        %v662 = vpow.pop %v661
        %v663 = vmul.f32 %v610, 1.442695
        %v664 = vpow.pop %v663
        %v665 = vmul.f32 %v611, 1.442695
        %v666 = vpow.pop %v665
        %v667 = vmul.f32 %v612, 1.442695
        %v668 = vpow.pop %v667
        %v669 = vmul.f32 %v613, 1.442695
        %v670 = vpow.pop %v669
        %v671 = vmul.f32 %v614, 1.442695
        %v672 = vpow.pop %v671
        %v673 = vmul.f32 %v615, 1.442695
        %v674 = vpow.pop %v673
        %v675 = vmul.f32 %v616, 1.442695
        %v676 = vpow.pop %v675
        %v677 = vmul.f32 %v617, 1.442695
        %v678 = vpow.pop %v677
        %v679 = vmul.f32 %v618, 1.442695
        %v680 = vpow.pop %v679
        %v681 = vmul.f32 %v619, 1.442695
        %v682 = vpow.pop %v681
        %v683 = vmul.f32 %v620, 1.442695
        %v684 = vpow.pop %v683
        %v685 = vsel %vm581, 16843009, 0
        %v686 = vsel %vm582, 16843009, 0
        %v687 = vsel %vm583, 16843009, 0
        %v688 = vsel %vm584, 16843009, 0
        %v689 = vsel %vm585, 16843009, 0
        %v690 = vsel %vm586, 16843009, 0
        %v691 = vsel %vm587, 16843009, 0
        %v692 = vsel %vm588, 16843009, 0
        %v693 = vunpack.c.0.s8 %v685
        %v694 = vunpack.c.0.s8 %v686
        %v695 = vunpack.c.1.s8 %v685
        %v696 = vunpack.c.1.s8 %v686
        %v697 = vunpack.c.2.s8 %v685
        %v698 = vunpack.c.2.s8 %v686
        %v699 = vunpack.c.3.s8 %v685
        %v700 = vunpack.c.3.s8 %v686
        %v701 = vunpack.c.0.s8 %v687
        %v702 = vunpack.c.0.s8 %v688
        %v703 = vunpack.c.1.s8 %v687
        %v704 = vunpack.c.1.s8 %v688
        %v705 = vunpack.c.2.s8 %v687
        %v706 = vunpack.c.2.s8 %v688
        %v707 = vunpack.c.3.s8 %v687
        %v708 = vunpack.c.3.s8 %v688
        %v709 = vunpack.c.0.s8 %v689
        %v710 = vunpack.c.0.s8 %v690
        %v711 = vunpack.c.1.s8 %v689
        %v712 = vunpack.c.1.s8 %v690
        %v713 = vunpack.c.2.s8 %v689
        %v714 = vunpack.c.2.s8 %v690
        %v715 = vunpack.c.3.s8 %v689
        %v716 = vunpack.c.3.s8 %v690
        %v717 = vunpack.c.0.s8 %v691
        %v718 = vunpack.c.0.s8 %v692
        %v719 = vunpack.c.1.s8 %v691
        %v720 = vunpack.c.1.s8 %v692
        %v721 = vunpack.c.2.s8 %v691
        %v722 = vunpack.c.2.s8 %v692
        %v723 = vunpack.c.3.s8 %v691
        %v724 = vunpack.c.3.s8 %v692
        %v725 = vpack.c.b16 %v694, %v693
        %v726 = vpack.c.b8 %v725, %v725
        %v727 = vpack.c.b16 %v696, %v695
        %v728 = vpack.c.b8 %v727, %v727
        %v729 = vpack.c.b16 %v698, %v697
        %v730 = vpack.c.b8 %v729, %v729
        %v731 = vpack.c.b16 %v700, %v699
        %v732 = vpack.c.b8 %v731, %v731
        %v733 = vpack.c.b16 %v702, %v701
        %v734 = vpack.c.b8 %v733, %v733
        %v735 = vpack.c.b16 %v704, %v703
        %v736 = vpack.c.b8 %v735, %v735
        %v737 = vpack.c.b16 %v706, %v705
        %v738 = vpack.c.b8 %v737, %v737
        %v739 = vpack.c.b16 %v708, %v707
        %v740 = vpack.c.b8 %v739, %v739
        %v741 = vpack.c.b16 %v710, %v709
        %v742 = vpack.c.b8 %v741, %v741
        %v743 = vpack.c.b16 %v712, %v711
        %v744 = vpack.c.b8 %v743, %v743
        %v745 = vpack.c.b16 %v714, %v713
        %v746 = vpack.c.b8 %v745, %v745
        %v747 = vpack.c.b16 %v716, %v715
        %v748 = vpack.c.b8 %v747, %v747
        %v749 = vpack.c.b16 %v718, %v717
        %v750 = vpack.c.b8 %v749, %v749
        %v751 = vpack.c.b16 %v720, %v719
        %v752 = vpack.c.b8 %v751, %v751
        %v753 = vpack.c.b16 %v722, %v721
        %v754 = vpack.c.b8 %v753, %v753
        %v755 = vpack.c.b16 %v724, %v723
        %v756 = vpack.c.b8 %v755, %v755
        %vm757 = vnez %v726
        %vm758 = vnez %v728
        %vm759 = vnez %v730
        %vm760 = vnez %v732
        %vm761 = vnez %v734
        %vm762 = vnez %v736
        %vm763 = vnez %v738
        %vm764 = vnez %v740
        %vm765 = vnez %v742
        %vm766 = vnez %v744
        %vm767 = vnez %v746
        %vm768 = vnez %v748
        %vm769 = vnez %v750
        %vm770 = vnez %v752
        %vm771 = vnez %v754
        %vm772 = vnez %v756
        %v773 = vsel %vm757, 16843009, 0
        %v774 = vsel %vm758, 16843009, 0
        %v775 = vsel %vm759, 16843009, 0
        %v776 = vsel %vm760, 16843009, 0
        %v777 = vsel %vm761, 16843009, 0
        %v778 = vsel %vm762, 16843009, 0
        %v779 = vsel %vm763, 16843009, 0
        %v780 = vsel %vm764, 16843009, 0
        %v781 = vsel %vm765, 16843009, 0
        %v782 = vsel %vm766, 16843009, 0
        %v783 = vsel %vm767, 16843009, 0
        %v784 = vsel %vm768, 16843009, 0
        %v785 = vsel %vm769, 16843009, 0
        %v786 = vsel %vm770, 16843009, 0
        %v787 = vsel %vm771, 16843009, 0
        %v788 = vsel %vm772, 16843009, 0
        %v789 = vunpack.c.0.s8 %v773
        %v790 = vunpack.c.1.s8 %v773
        %v791 = vunpack.c.0.s8 %v774
        %v792 = vunpack.c.1.s8 %v774
        %v793 = vunpack.c.0.s8 %v775
        %v794 = vunpack.c.1.s8 %v775
        %v795 = vunpack.c.0.s8 %v776
        %v796 = vunpack.c.1.s8 %v776
        %v797 = vunpack.c.0.s8 %v777
        %v798 = vunpack.c.1.s8 %v777
        %v799 = vunpack.c.0.s8 %v778
        %v800 = vunpack.c.1.s8 %v778
        %v801 = vunpack.c.0.s8 %v779
        %v802 = vunpack.c.1.s8 %v779
        %v803 = vunpack.c.0.s8 %v780
        %v804 = vunpack.c.1.s8 %v780
        %v805 = vunpack.c.0.s8 %v781
        %v806 = vunpack.c.1.s8 %v781
        %v807 = vunpack.c.0.s8 %v782
        %v808 = vunpack.c.1.s8 %v782
        %v809 = vunpack.c.0.s8 %v783
        %v810 = vunpack.c.1.s8 %v783
        %v811 = vunpack.c.0.s8 %v784
        %v812 = vunpack.c.1.s8 %v784
        %v813 = vunpack.c.0.s8 %v785
        %v814 = vunpack.c.1.s8 %v785
        %v815 = vunpack.c.0.s8 %v786
        %v816 = vunpack.c.1.s8 %v786
        %v817 = vunpack.c.0.s8 %v787
        %v818 = vunpack.c.1.s8 %v787
        %v819 = vunpack.c.0.s8 %v788
        %v820 = vunpack.c.1.s8 %v788
        %vm821 = vcmp.ne.s32.totalorder %v789, 0
        %vm822 = vcmp.ne.s32.totalorder %v790, 0
        %vm823 = vcmp.ne.s32.totalorder %v791, 0
        %vm824 = vcmp.ne.s32.totalorder %v792, 0
        %vm825 = vcmp.ne.s32.totalorder %v793, 0
        %vm826 = vcmp.ne.s32.totalorder %v794, 0
        %vm827 = vcmp.ne.s32.totalorder %v795, 0
        %vm828 = vcmp.ne.s32.totalorder %v796, 0
        %vm829 = vcmp.ne.s32.totalorder %v797, 0
        %vm830 = vcmp.ne.s32.totalorder %v798, 0
        %vm831 = vcmp.ne.s32.totalorder %v799, 0
        %vm832 = vcmp.ne.s32.totalorder %v800, 0
        %vm833 = vcmp.ne.s32.totalorder %v801, 0
        %vm834 = vcmp.ne.s32.totalorder %v802, 0
        %vm835 = vcmp.ne.s32.totalorder %v803, 0
        %vm836 = vcmp.ne.s32.totalorder %v804, 0
        %vm837 = vcmp.ne.s32.totalorder %v805, 0
        %vm838 = vcmp.ne.s32.totalorder %v806, 0
        %vm839 = vcmp.ne.s32.totalorder %v807, 0
        %vm840 = vcmp.ne.s32.totalorder %v808, 0
        %vm841 = vcmp.ne.s32.totalorder %v809, 0
        %vm842 = vcmp.ne.s32.totalorder %v810, 0
        %vm843 = vcmp.ne.s32.totalorder %v811, 0
        %vm844 = vcmp.ne.s32.totalorder %v812, 0
        %vm845 = vcmp.ne.s32.totalorder %v813, 0
        %vm846 = vcmp.ne.s32.totalorder %v814, 0
        %vm847 = vcmp.ne.s32.totalorder %v815, 0
        %vm848 = vcmp.ne.s32.totalorder %v816, 0
        %vm849 = vcmp.ne.s32.totalorder %v817, 0
        %vm850 = vcmp.ne.s32.totalorder %v818, 0
        %vm851 = vcmp.ne.s32.totalorder %v819, 0
        %vm852 = vcmp.ne.s32.totalorder %v820, 0
        %v853 = vsel %vm821, %v622, 0.0
        %v854 = vsel %vm822, %v624, 0.0
        %v855 = vsel %vm823, %v626, 0.0
        %v856 = vsel %vm824, %v628, 0.0
        %v857 = vsel %vm825, %v630, 0.0
        %v858 = vsel %vm826, %v632, 0.0
        %v859 = vsel %vm827, %v634, 0.0
        %v860 = vsel %vm828, %v636, 0.0
        %v861 = vsel %vm829, %v638, 0.0
        %v862 = vsel %vm830, %v640, 0.0
        %v863 = vsel %vm831, %v642, 0.0
        %v864 = vsel %vm832, %v644, 0.0
        %v865 = vsel %vm833, %v646, 0.0
        %v866 = vsel %vm834, %v648, 0.0
        %v867 = vsel %vm835, %v650, 0.0
        %v868 = vsel %vm836, %v652, 0.0
        %v869 = vsel %vm837, %v654, 0.0
        %v870 = vsel %vm838, %v656, 0.0
        %v871 = vsel %vm839, %v658, 0.0
        %v872 = vsel %vm840, %v660, 0.0
        %v873 = vsel %vm841, %v662, 0.0
        %v874 = vsel %vm842, %v664, 0.0
        %v875 = vsel %vm843, %v666, 0.0
        %v876 = vsel %vm844, %v668, 0.0
        %v877 = vsel %vm845, %v670, 0.0
        %v878 = vsel %vm846, %v672, 0.0
        %v879 = vsel %vm847, %v674, 0.0
        %v880 = vsel %vm848, %v676, 0.0
        %v881 = vsel %vm849, %v678, 0.0
        %v882 = vsel %vm850, %v680, 0.0
        %v883 = vsel %vm851, %v682, 0.0
        %v884 = vsel %vm852, %v684, 0.0
        %v885 = vld [vmem:[#allocation2] sm:$0xff]
        %v886 = vld [vmem:[#allocation2 + $0x8] sm:$0xff]
        %v887 = vld [vmem:[#allocation2 + $0x10] sm:$0xff]
        %v888 = vld [vmem:[#allocation2 + $0x18] sm:$0xff]
        %v889 = vld [vmem:[#allocation2 + $0x20] sm:$0xff]
        %v890 = vld [vmem:[#allocation2 + $0x28] sm:$0xff]
        %v891 = vld [vmem:[#allocation2 + $0x30] sm:$0xff]
        %v892 = vld [vmem:[#allocation2 + $0x38] sm:$0xff]
        %v893 = vld [vmem:[#allocation2 + $0x40] sm:$0xff]
        %v894 = vld [vmem:[#allocation2 + $0x48] sm:$0xff]
        %v895 = vld [vmem:[#allocation2 + $0x50] sm:$0xff]
        %v896 = vld [vmem:[#allocation2 + $0x58] sm:$0xff]
        %v897 = vld [vmem:[#allocation2 + $0x60] sm:$0xff]
        %v898 = vld [vmem:[#allocation2 + $0x68] sm:$0xff]
        %v899 = vld [vmem:[#allocation2 + $0x70] sm:$0xff]
        %v900 = vld [vmem:[#allocation2 + $0x78] sm:$0xff]
        %v901 = vld [vmem:[%s307] sm:$0xff]
        %v902 = vld [vmem:[%s307 + $0x8] sm:$0xff]
        %v903 = vld [vmem:[%s307 + $0x10] sm:$0xff]
        %v904 = vld [vmem:[%s307 + $0x18] sm:$0xff]
        %v905 = vld [vmem:[%s307 + $0x20] sm:$0xff]
        %v906 = vld [vmem:[%s307 + $0x28] sm:$0xff]
        %v907 = vld [vmem:[%s307 + $0x30] sm:$0xff]
        %v908 = vld [vmem:[%s307 + $0x38] sm:$0xff]
        %v909 = vld [vmem:[%s307 + $0x40] sm:$0xff]
        %v910 = vld [vmem:[%s307 + $0x48] sm:$0xff]
        %v911 = vld [vmem:[%s307 + $0x50] sm:$0xff]
        %v912 = vld [vmem:[%s307 + $0x58] sm:$0xff]
        %v913 = vld [vmem:[%s307 + $0x60] sm:$0xff]
        %v914 = vld [vmem:[%s307 + $0x68] sm:$0xff]
        %v915 = vld [vmem:[%s307 + $0x70] sm:$0xff]
        %v916 = vld [vmem:[%s307 + $0x78] sm:$0xff]
        %v917 = vld [vmem:[%s307 + $0x80] sm:$0xff]
        %v918 = vld [vmem:[%s307 + $0x88] sm:$0xff]
        %v919 = vld [vmem:[%s307 + $0x90] sm:$0xff]
        %v920 = vld [vmem:[%s307 + $0x98] sm:$0xff]
        %v921 = vld [vmem:[%s307 + $0xa0] sm:$0xff]
        %v922 = vld [vmem:[%s307 + $0xa8] sm:$0xff]
        %v923 = vld [vmem:[%s307 + $0xb0] sm:$0xff]
        %v924 = vld [vmem:[%s307 + $0xb8] sm:$0xff]
        %v925 = vld [vmem:[%s307 + $0xc0] sm:$0xff]
        %v926 = vld [vmem:[%s307 + $0xc8] sm:$0xff]
        %v927 = vld [vmem:[%s307 + $0xd0] sm:$0xff]
        %v928 = vld [vmem:[%s307 + $0xd8] sm:$0xff]
        %v929 = vld [vmem:[%s307 + $0xe0] sm:$0xff]
        %v930 = vld [vmem:[%s307 + $0xe8] sm:$0xff]
        %v931 = vld [vmem:[%s307 + $0xf0] sm:$0xff]
        %v932 = vld [vmem:[%s307 + $0xf8] sm:$0xff]
        %933 = vmatprep.subr.mxu0 0.0
        %934 = vmatpush1.msra.mxu0 %v901
        %935 = vmatprep.subr.mxu0 0.0
        %936 = vmatpush1.msra.mxu0 %v902
        %937 = vmatprep.subr.mxu0 0.0
        %938 = vmatpush1.msra.mxu0 %v903
        %939 = vmatprep.subr.mxu0 0.0
        %940 = vmatpush1.msra.mxu0 %v904
        %941 = vmatprep.subr.mxu0 0.0
        %942 = vmatpush1.msra.mxu0 %v905
        %943 = vmatprep.subr.mxu0 0.0
        %944 = vmatpush1.msra.mxu0 %v906
        %945 = vmatprep.subr.mxu0 0.0
        %946 = vmatpush1.msra.mxu0 %v907
        %947 = vmatprep.subr.mxu0 0.0
        %948 = vmatpush1.msra.mxu0 %v908
        %949 = vmatprep.subr.mxu0 0.0
        %950 = vmatpush1.msra.mxu0 %v909
        %951 = vmatprep.subr.mxu0 0.0
        %952 = vmatpush1.msra.mxu0 %v910
        %953 = vmatprep.subr.mxu0 0.0
        %954 = vmatpush1.msra.mxu0 %v911
        %955 = vmatprep.subr.mxu0 0.0
        %956 = vmatpush1.msra.mxu0 %v912
        %957 = vmatprep.subr.mxu0 0.0
        %958 = vmatpush1.msra.mxu0 %v913
        %959 = vmatprep.subr.mxu0 0.0
        %960 = vmatpush1.msra.mxu0 %v914
        %961 = vmatprep.subr.mxu0 0.0
        %962 = vmatpush1.msra.mxu0 %v915
        %963 = vmatprep.subr.mxu0 0.0
        %964 = vmatpush1.msra.mxu0 %v916
        %965 = vmatprep.subr.mxu0 0.0
        %966 = vmatpush1.msra.mxu0 %v917
        %967 = vmatprep.subr.mxu0 0.0
        %968 = vmatpush1.msra.mxu0 %v918
        %969 = vmatprep.subr.mxu0 0.0
        %970 = vmatpush1.msra.mxu0 %v919
        %971 = vmatprep.subr.mxu0 0.0
        %972 = vmatpush1.msra.mxu0 %v920
        %973 = vmatprep.subr.mxu0 0.0
        %974 = vmatpush1.msra.mxu0 %v921
        %975 = vmatprep.subr.mxu0 0.0
        %976 = vmatpush1.msra.mxu0 %v922
        %977 = vmatprep.subr.mxu0 0.0
        %978 = vmatpush1.msra.mxu0 %v923
        %979 = vmatprep.subr.mxu0 0.0
        %980 = vmatpush1.msra.mxu0 %v924
        %981 = vmatprep.subr.mxu0 0.0
        %982 = vmatpush1.msra.mxu0 %v925
        %983 = vmatprep.subr.mxu0 0.0
        %984 = vmatpush1.msra.mxu0 %v926
        %985 = vmatprep.subr.mxu0 0.0
        %986 = vmatpush1.msra.mxu0 %v927
        %987 = vmatprep.subr.mxu0 0.0
        %988 = vmatpush1.msra.mxu0 %v928
        %989 = vmatprep.subr.mxu0 0.0
        %990 = vmatpush1.msra.mxu0 %v929
        %991 = vmatprep.subr.mxu0 0.0
        %992 = vmatpush1.msra.mxu0 %v930
        %993 = vmatprep.subr.mxu0 0.0
        %994 = vmatpush1.msra.mxu0 %v931
        %995 = vmatprep.subr.mxu0 0.0
        %996 = vmatpush1.msra.mxu0 %v932
        %997 = vmatprep.mubr.f32.mxu0 %v854
        %998 = vmatmul.mubr.f32.gmra.mrb[0].mxu0 %v853
        %v999 = vpop.f32.mrb[0].mxu0
        %v1000 = vadd.f32 0.0, %v999
        %v1001 = vpop.f32.mrb[0].mxu0
        %1002 = vmatprep.mubr.f32.mxu0 %v856
        %1003 = vmatmul.mubr.f32.gmra.mrb[0].mxu0 %v855
        %v1004 = vpop.f32.mrb[0].mxu0
        %v1005 = vadd.f32 0.0, %v1004
        %v1006 = vpop.f32.mrb[0].mxu0
        %1007 = vmatprep.mubr.f32.mxu0 %v858
        %1008 = vmatmul.mubr.f32.gmra.mrb[0].mxu0 %v857
        %v1009 = vpop.f32.mrb[0].mxu0
        %v1010 = vadd.f32 0.0, %v1009
        %v1011 = vpop.f32.mrb[0].mxu0
        %1012 = vmatprep.mubr.f32.mxu0 %v860
        %1013 = vmatmul.mubr.f32.gmra.mrb[0].mxu0 %v859
        %v1014 = vpop.f32.mrb[0].mxu0
        %v1015 = vadd.f32 0.0, %v1014
        %v1016 = vpop.f32.mrb[0].mxu0
        %1017 = vmatprep.mubr.f32.mxu0 %v862
        %1018 = vmatmul.mubr.f32.gmra.mrb[0].mxu0 %v861
        %v1019 = vpop.f32.mrb[0].mxu0
        %v1020 = vadd.f32 0.0, %v1019
        %v1021 = vpop.f32.mrb[0].mxu0
        %1022 = vmatprep.mubr.f32.mxu0 %v864
        %1023 = vmatmul.mubr.f32.gmra.mrb[0].mxu0 %v863
        %v1024 = vpop.f32.mrb[0].mxu0
        %v1025 = vadd.f32 0.0, %v1024
        %v1026 = vpop.f32.mrb[0].mxu0
        %1027 = vmatprep.mubr.f32.mxu0 %v866
        %1028 = vmatmul.mubr.f32.gmra.mrb[0].mxu0 %v865
        %v1029 = vpop.f32.mrb[0].mxu0
        %v1030 = vadd.f32 0.0, %v1029
        %v1031 = vpop.f32.mrb[0].mxu0
        %1032 = vmatprep.mubr.f32.mxu0 %v868
        %1033 = vmatmul.mubr.f32.gmra.mrb[0].mxu0 %v867
        %v1034 = vpop.f32.mrb[0].mxu0
        %v1035 = vadd.f32 0.0, %v1034
        %v1036 = vpop.f32.mrb[0].mxu0
        %1037 = vmatprep.mubr.f32.mxu0 %v870
        %1038 = vmatmul.mubr.f32.gmra.mrb[0].mxu0 %v869
        %v1039 = vpop.f32.mrb[0].mxu0
        %v1040 = vadd.f32 0.0, %v1039
        %v1041 = vpop.f32.mrb[0].mxu0
        %1042 = vmatprep.mubr.f32.mxu0 %v872
        %1043 = vmatmul.mubr.f32.gmra.mrb[0].mxu0 %v871
        %v1044 = vpop.f32.mrb[0].mxu0
        %v1045 = vadd.f32 0.0, %v1044
        %v1046 = vpop.f32.mrb[0].mxu0
        %1047 = vmatprep.mubr.f32.mxu0 %v874
        %1048 = vmatmul.mubr.f32.gmra.mrb[0].mxu0 %v873
        %v1049 = vpop.f32.mrb[0].mxu0
        %v1050 = vadd.f32 0.0, %v1049
        %v1051 = vpop.f32.mrb[0].mxu0
        %1052 = vmatprep.mubr.f32.mxu0 %v876
        %1053 = vmatmul.mubr.f32.gmra.mrb[0].mxu0 %v875
        %v1054 = vpop.f32.mrb[0].mxu0
        %v1055 = vadd.f32 0.0, %v1054
        %v1056 = vpop.f32.mrb[0].mxu0
        %1057 = vmatprep.mubr.f32.mxu0 %v878
        %1058 = vmatmul.mubr.f32.gmra.mrb[0].mxu0 %v877
        %v1059 = vpop.f32.mrb[0].mxu0
        %v1060 = vadd.f32 0.0, %v1059
        %v1061 = vpop.f32.mrb[0].mxu0
        %1062 = vmatprep.mubr.f32.mxu0 %v880
        %1063 = vmatmul.mubr.f32.gmra.mrb[0].mxu0 %v879
        %v1064 = vpop.f32.mrb[0].mxu0
        %v1065 = vadd.f32 0.0, %v1064
        %v1066 = vpop.f32.mrb[0].mxu0
        %1067 = vmatprep.mubr.f32.mxu0 %v882
        %1068 = vmatmul.mubr.f32.gmra.mrb[0].mxu0 %v881
        %v1069 = vpop.f32.mrb[0].mxu0
        %v1070 = vadd.f32 0.0, %v1069
        %v1071 = vpop.f32.mrb[0].mxu0
        %1072 = vmatprep.mubr.f32.mxu0 %v884
        %1073 = vmatmul.mubr.f32.gmra.mrb[0].mxu0 %v883
        %v1074 = vpop.f32.mrb[0].mxu0
        %v1075 = vadd.f32 0.0, %v1074
        %v1076 = vpop.f32.mrb[0].mxu0
        %1077 = vdwg.mxu0
        %v1078 = vadd.f32 %v885, %v1000
        %v1079 = vadd.f32 %v886, %v1005
        %v1080 = vadd.f32 %v887, %v1010
        %v1081 = vadd.f32 %v888, %v1015
        %v1082 = vadd.f32 %v889, %v1020
        %v1083 = vadd.f32 %v890, %v1025
        %v1084 = vadd.f32 %v891, %v1030
        %v1085 = vadd.f32 %v892, %v1035
        %v1086 = vadd.f32 %v893, %v1040
        %v1087 = vadd.f32 %v894, %v1045
        %v1088 = vadd.f32 %v895, %v1050
        %v1089 = vadd.f32 %v896, %v1055
        %v1090 = vadd.f32 %v897, %v1060
        %v1091 = vadd.f32 %v898, %v1065
        %v1092 = vadd.f32 %v899, %v1070
        %v1093 = vadd.f32 %v900, %v1075
        %1094 = vst [vmem:[#allocation2] sm:$0xff] %v1078
        %1095 = vst [vmem:[#allocation2 + $0x8] sm:$0xff] %v1079
        %1096 = vst [vmem:[#allocation2 + $0x10] sm:$0xff] %v1080
        %1097 = vst [vmem:[#allocation2 + $0x18] sm:$0xff] %v1081
        %1098 = vst [vmem:[#allocation2 + $0x20] sm:$0xff] %v1082
        %1099 = vst [vmem:[#allocation2 + $0x28] sm:$0xff] %v1083
        %1100 = vst [vmem:[#allocation2 + $0x30] sm:$0xff] %v1084
        %1101 = vst [vmem:[#allocation2 + $0x38] sm:$0xff] %v1085
        %1102 = vst [vmem:[#allocation2 + $0x40] sm:$0xff] %v1086
        %1103 = vst [vmem:[#allocation2 + $0x48] sm:$0xff] %v1087
        %1104 = vst [vmem:[#allocation2 + $0x50] sm:$0xff] %v1088
        %1105 = vst [vmem:[#allocation2 + $0x58] sm:$0xff] %v1089
        %1106 = vst [vmem:[#allocation2 + $0x60] sm:$0xff] %v1090
        %1107 = vst [vmem:[#allocation2 + $0x68] sm:$0xff] %v1091
        %1108 = vst [vmem:[#allocation2 + $0x70] sm:$0xff] %v1092
        %1109 = vst [vmem:[#allocation2 + $0x78] sm:$0xff] %v1093
        %p1110 = scmp.eq.s32.totalorder %s20, 1
        // Predicated region
        $region64: #{graph_attention_layer.1} parent=54 // pred_check
          %p1111 = pneg %p1110
        $region65: #{graph_attention_layer.1} parent=54 // pred_check_branch
          %1113 = sbr.rel (%p1111) target = $region67
        $region66: #{graph_attention_layer.1} parent=54 // pred_region
          %v1114 = vld [vmem:[#allocation2] sm:$0xff]
          %v1115 = vld [vmem:[#allocation2 + $0x8] sm:$0xff]
          %v1116 = vld [vmem:[#allocation2 + $0x10] sm:$0xff]
          %v1117 = vld [vmem:[#allocation2 + $0x18] sm:$0xff]
          %v1118 = vld [vmem:[#allocation2 + $0x20] sm:$0xff]
          %v1119 = vld [vmem:[#allocation2 + $0x28] sm:$0xff]
          %v1120 = vld [vmem:[#allocation2 + $0x30] sm:$0xff]
          %v1121 = vld [vmem:[#allocation2 + $0x38] sm:$0xff]
          %v1122 = vld [vmem:[#allocation2 + $0x40] sm:$0xff]
          %v1123 = vld [vmem:[#allocation2 + $0x48] sm:$0xff]
          %v1124 = vld [vmem:[#allocation2 + $0x50] sm:$0xff]
          %v1125 = vld [vmem:[#allocation2 + $0x58] sm:$0xff]
          %v1126 = vld [vmem:[#allocation2 + $0x60] sm:$0xff]
          %v1127 = vld [vmem:[#allocation2 + $0x68] sm:$0xff]
          %v1128 = vld [vmem:[#allocation2 + $0x70] sm:$0xff]
          %v1129 = vld [vmem:[#allocation2 + $0x78] sm:$0xff]
          %vm1130 = vcmp.eq.f32.partialorder %v1114, 0.0
          %vm1131 = vcmp.eq.f32.partialorder %v1115, 0.0
          %vm1132 = vcmp.eq.f32.partialorder %v1116, 0.0
          %vm1133 = vcmp.eq.f32.partialorder %v1117, 0.0
          %vm1134 = vcmp.eq.f32.partialorder %v1118, 0.0
          %vm1135 = vcmp.eq.f32.partialorder %v1119, 0.0
          %vm1136 = vcmp.eq.f32.partialorder %v1120, 0.0
          %vm1137 = vcmp.eq.f32.partialorder %v1121, 0.0
          %vm1138 = vcmp.eq.f32.partialorder %v1122, 0.0
          %vm1139 = vcmp.eq.f32.partialorder %v1123, 0.0
          %vm1140 = vcmp.eq.f32.partialorder %v1124, 0.0
          %vm1141 = vcmp.eq.f32.partialorder %v1125, 0.0
          %vm1142 = vcmp.eq.f32.partialorder %v1126, 0.0
          %vm1143 = vcmp.eq.f32.partialorder %v1127, 0.0
          %vm1144 = vcmp.eq.f32.partialorder %v1128, 0.0
          %vm1145 = vcmp.eq.f32.partialorder %v1129, 0.0
          %v1146 = vsel %vm1130, 1.0, %v1114
          %v1147 = vsel %vm1131, 1.0, %v1115
          %v1148 = vsel %vm1132, 1.0, %v1116
          %v1149 = vsel %vm1133, 1.0, %v1117
          %v1150 = vsel %vm1134, 1.0, %v1118
          %v1151 = vsel %vm1135, 1.0, %v1119
          %v1152 = vsel %vm1136, 1.0, %v1120
          %v1153 = vsel %vm1137, 1.0, %v1121
          %v1154 = vsel %vm1138, 1.0, %v1122
          %v1155 = vsel %vm1139, 1.0, %v1123
          %v1156 = vsel %vm1140, 1.0, %v1124
          %v1157 = vsel %vm1141, 1.0, %v1125
          %v1158 = vsel %vm1142, 1.0, %v1126
          %v1159 = vsel %vm1143, 1.0, %v1127
          %v1160 = vsel %vm1144, 1.0, %v1128
          %v1161 = vsel %vm1145, 1.0, %v1129
          %1163 = vset.pattern.permute.xlu0 32
          %1164 = vperm.xlu0 %1163, %v1146
          %v1165 = vpop.permute.xlu0 %1164
          %1168 = vset.pattern.permute.xlu0 32
          %1169 = vperm.xlu0 %1168, %v1147
          %v1170 = vpop.permute.xlu0 %1169
          %1173 = vset.pattern.permute.xlu0 32
          %1174 = vperm.xlu0 %1173, %v1148
          %v1175 = vpop.permute.xlu0 %1174
          %1178 = vset.pattern.permute.xlu0 32
          %1179 = vperm.xlu0 %1178, %v1149
          %v1180 = vpop.permute.xlu0 %1179
          %1183 = vset.pattern.permute.xlu0 32
          %1184 = vperm.xlu0 %1183, %v1150
          %v1185 = vpop.permute.xlu0 %1184
          %1188 = vset.pattern.permute.xlu0 32
          %1189 = vperm.xlu0 %1188, %v1151
          %v1190 = vpop.permute.xlu0 %1189
          %1193 = vset.pattern.permute.xlu0 32
          %1194 = vperm.xlu0 %1193, %v1152
          %v1195 = vpop.permute.xlu0 %1194
          %1198 = vset.pattern.permute.xlu0 32
          %1199 = vperm.xlu0 %1198, %v1153
          %v1200 = vpop.permute.xlu0 %1199
          %1203 = vset.pattern.permute.xlu0 32
          %1204 = vperm.xlu0 %1203, %v1154
          %v1205 = vpop.permute.xlu0 %1204
          %1208 = vset.pattern.permute.xlu0 32
          %1209 = vperm.xlu0 %1208, %v1155
          %v1210 = vpop.permute.xlu0 %1209
          %1213 = vset.pattern.permute.xlu0 32
          %1214 = vperm.xlu0 %1213, %v1156
          %v1215 = vpop.permute.xlu0 %1214
          %1218 = vset.pattern.permute.xlu0 32
          %1219 = vperm.xlu0 %1218, %v1157
          %v1220 = vpop.permute.xlu0 %1219
          %1223 = vset.pattern.permute.xlu0 32
          %1224 = vperm.xlu0 %1223, %v1158
          %v1225 = vpop.permute.xlu0 %1224
          %1228 = vset.pattern.permute.xlu0 32
          %1229 = vperm.xlu0 %1228, %v1159
          %v1230 = vpop.permute.xlu0 %1229
          %1233 = vset.pattern.permute.xlu0 32
          %1234 = vperm.xlu0 %1233, %v1160
          %v1235 = vpop.permute.xlu0 %1234
          %1238 = vset.pattern.permute.xlu0 32
          %1239 = vperm.xlu0 %1238, %v1161
          %v1240 = vpop.permute.xlu0 %1239
          %v1242 = vrcp.pop %v1165
          %v1243 = vmul.f32 %v1114, %v1242
          %v1244 = vrcp.pop %v1170
          %v1245 = vmul.f32 %v1115, %v1244
          %v1246 = vrcp.pop %v1175
          %v1247 = vmul.f32 %v1116, %v1246
          %v1248 = vrcp.pop %v1180
          %v1249 = vmul.f32 %v1117, %v1248
          %v1250 = vrcp.pop %v1185
          %v1251 = vmul.f32 %v1118, %v1250
          %v1252 = vrcp.pop %v1190
          %v1253 = vmul.f32 %v1119, %v1252
          %v1254 = vrcp.pop %v1195
          %v1255 = vmul.f32 %v1120, %v1254
          %v1256 = vrcp.pop %v1200
          %v1257 = vmul.f32 %v1121, %v1256
          %v1258 = vrcp.pop %v1205
          %v1259 = vmul.f32 %v1122, %v1258
          %v1260 = vrcp.pop %v1210
          %v1261 = vmul.f32 %v1123, %v1260
          %v1262 = vrcp.pop %v1215
          %v1263 = vmul.f32 %v1124, %v1262
          %v1264 = vrcp.pop %v1220
          %v1265 = vmul.f32 %v1125, %v1264
          %v1266 = vrcp.pop %v1225
          %v1267 = vmul.f32 %v1126, %v1266
          %v1268 = vrcp.pop %v1230
          %v1269 = vmul.f32 %v1127, %v1268
          %v1270 = vrcp.pop %v1235
          %v1271 = vmul.f32 %v1128, %v1270
          %v1272 = vrcp.pop %v1240
          %v1273 = vmul.f32 %v1129, %v1272
          %vm1274 = vcmp.gt.f32.partialorder %v1243, 0.0
          %vm1275 = vcmp.gt.f32.partialorder %v1245, 0.0
          %vm1276 = vcmp.gt.f32.partialorder %v1247, 0.0
          %vm1277 = vcmp.gt.f32.partialorder %v1249, 0.0
          %vm1278 = vcmp.gt.f32.partialorder %v1251, 0.0
          %vm1279 = vcmp.gt.f32.partialorder %v1253, 0.0
          %vm1280 = vcmp.gt.f32.partialorder %v1255, 0.0
          %vm1281 = vcmp.gt.f32.partialorder %v1257, 0.0
          %vm1282 = vcmp.gt.f32.partialorder %v1259, 0.0
          %vm1283 = vcmp.gt.f32.partialorder %v1261, 0.0
          %vm1284 = vcmp.gt.f32.partialorder %v1263, 0.0
          %vm1285 = vcmp.gt.f32.partialorder %v1265, 0.0
          %vm1286 = vcmp.gt.f32.partialorder %v1267, 0.0
          %vm1287 = vcmp.gt.f32.partialorder %v1269, 0.0
          %vm1288 = vcmp.gt.f32.partialorder %v1271, 0.0
          %vm1289 = vcmp.gt.f32.partialorder %v1273, 0.0
          %v1290 = vmul.f32 %v1243, 1.442695
          %v1291 = vpow.pop %v1290
          %v1292 = vmul.f32 %v1245, 1.442695
          %v1293 = vpow.pop %v1292
          %v1294 = vmul.f32 %v1247, 1.442695
          %v1295 = vpow.pop %v1294
          %v1296 = vmul.f32 %v1249, 1.442695
          %v1297 = vpow.pop %v1296
          %v1298 = vmul.f32 %v1251, 1.442695
          %v1299 = vpow.pop %v1298
          %v1300 = vmul.f32 %v1253, 1.442695
          %v1301 = vpow.pop %v1300
          %v1302 = vmul.f32 %v1255, 1.442695
          %v1303 = vpow.pop %v1302
          %v1304 = vmul.f32 %v1257, 1.442695
          %v1305 = vpow.pop %v1304
          %v1306 = vmul.f32 %v1259, 1.442695
          %v1307 = vpow.pop %v1306
          %v1308 = vmul.f32 %v1261, 1.442695
          %v1309 = vpow.pop %v1308
          %v1310 = vmul.f32 %v1263, 1.442695
          %v1311 = vpow.pop %v1310
          %v1312 = vmul.f32 %v1265, 1.442695
          %v1313 = vpow.pop %v1312
          %v1314 = vmul.f32 %v1267, 1.442695
          %v1315 = vpow.pop %v1314
          %v1316 = vmul.f32 %v1269, 1.442695
          %v1317 = vpow.pop %v1316
          %v1318 = vmul.f32 %v1271, 1.442695
          %v1319 = vpow.pop %v1318
          %v1320 = vmul.f32 %v1273, 1.442695
          %v1321 = vpow.pop %v1320
          %v1322 = vsub.f32 %v1291, 1.0
          %v1323 = vsub.f32 %v1293, 1.0
          %v1324 = vsub.f32 %v1295, 1.0
          %v1325 = vsub.f32 %v1297, 1.0
          %v1326 = vsub.f32 %v1299, 1.0
          %v1327 = vsub.f32 %v1301, 1.0
          %v1328 = vsub.f32 %v1303, 1.0
          %v1329 = vsub.f32 %v1305, 1.0
          %v1330 = vsub.f32 %v1307, 1.0
          %v1331 = vsub.f32 %v1309, 1.0
          %v1332 = vsub.f32 %v1311, 1.0
          %v1333 = vsub.f32 %v1313, 1.0
          %v1334 = vsub.f32 %v1315, 1.0
          %v1335 = vsub.f32 %v1317, 1.0
          %v1336 = vsub.f32 %v1319, 1.0
          %v1337 = vsub.f32 %v1321, 1.0
          %v1338 = vsel %vm1274, %v1243, %v1322
          %v1339 = vsel %vm1275, %v1245, %v1323
          %v1340 = vsel %vm1276, %v1247, %v1324
          %v1341 = vsel %vm1277, %v1249, %v1325
          %v1342 = vsel %vm1278, %v1251, %v1326
          %v1343 = vsel %vm1279, %v1253, %v1327
          %v1344 = vsel %vm1280, %v1255, %v1328
          %v1345 = vsel %vm1281, %v1257, %v1329
          %v1346 = vsel %vm1282, %v1259, %v1330
          %v1347 = vsel %vm1283, %v1261, %v1331
          %v1348 = vsel %vm1284, %v1263, %v1332
          %v1349 = vsel %vm1285, %v1265, %v1333
          %v1350 = vsel %vm1286, %v1267, %v1334
          %v1351 = vsel %vm1287, %v1269, %v1335
          %v1352 = vsel %vm1288, %v1271, %v1336
          %v1353 = vsel %vm1289, %v1273, %v1337
          %1354 = vst [vmem:[%s313] sm:$0xff] %v1338
          %1355 = vst [vmem:[%s313 + $0x8] sm:$0xff] %v1339
          %1356 = vst [vmem:[%s313 + $0x10] sm:$0xff] %v1340
          %1357 = vst [vmem:[%s313 + $0x18] sm:$0xff] %v1341
          %1358 = vst [vmem:[%s313 + $0x20] sm:$0xff] %v1342
          %1359 = vst [vmem:[%s313 + $0x28] sm:$0xff] %v1343
          %1360 = vst [vmem:[%s313 + $0x30] sm:$0xff] %v1344
          %1361 = vst [vmem:[%s313 + $0x38] sm:$0xff] %v1345
          %1362 = vst [vmem:[%s313 + $0x40] sm:$0xff] %v1346
          %1363 = vst [vmem:[%s313 + $0x48] sm:$0xff] %v1347
          %1364 = vst [vmem:[%s313 + $0x50] sm:$0xff] %v1348
          %1365 = vst [vmem:[%s313 + $0x58] sm:$0xff] %v1349
          %1366 = vst [vmem:[%s313 + $0x60] sm:$0xff] %v1350
          %1367 = vst [vmem:[%s313 + $0x68] sm:$0xff] %v1351
          %1368 = vst [vmem:[%s313 + $0x70] sm:$0xff] %v1352
          %1369 = vst [vmem:[%s313 + $0x78] sm:$0xff] %v1353
        $region67: #{graph_attention_layer.1} parent=54 // pred_fallthru
          _
        %s1370 = smul.u32 16, %s19
        %p1371 = scmp.lt.s32.totalorder %s1370, 63
        %s1372 = scalar_select %p1371, %s1370, 63
        %s1373 = smul.addr %s1372, 8
        %s1374 = scalar_lea.vmem %s4, %s1373
        // Predicated region
        $region68: #{graph_attention_layer.1} parent=54 // pred_check
          %p1375 = pneg %p151
        $region69: #{graph_attention_layer.1} parent=54 // pred_check_branch
          %1377 = sbr.rel (%p1375) target = $region71
        $region70: #{graph_attention_layer.1} parent=54 // pred_region
          %s1378 = smul.u32 16, %s19
        $region71: #{graph_attention_layer.1} parent=54 // pred_fallthru
          _
      $region55: #{graph_attention_layer.1} parent=5 // pred_fallthru
        _
      %p1379 = scmp.le.s32.totalorder 2, %s10
      // Predicated region
      $region72: #{graph_attention_layer.1} parent=5 // pred_check
        %p1380 = pneg %p1379
      $region73: #{graph_attention_layer.1} parent=5 // pred_check_branch
        %1382 = sbr.rel (%p1380) target = $region75
      $region74: #{graph_attention_layer.1} parent=5 // pred_region
        %s1383 = ssub.s32 %s10, 2
        // Predicated region
        $region76: #{graph_attention_layer.1} parent=74 // pred_check
          %p1384 = pneg %p157
        $region77: #{graph_attention_layer.1} parent=74 // pred_check_branch
          %1386 = sbr.rel (%p1384) target = $region79
        $region78: #{graph_attention_layer.1} parent=74 // pred_region
          %s1387 = smul.u32 16, %s21
          %p1388 = scmp.lt.s32.totalorder %s1387, 63
          %s1389 = scalar_select %p1388, %s1387, 63
          %s1390 = smul.addr %s1389, 8
          %s1391 = scalar_lea.vmem %s4, %s1390
        $region79: #{graph_attention_layer.1} parent=74 // pred_fallthru
          _
      $region75: #{graph_attention_layer.1} parent=5 // pred_fallthru
        _
    $region6: #{graph_attention_layer.1} parent=1 // loop_footer
      %s14 = sadd.s32 1, %s10
    $region7: #{graph_attention_layer.1} parent=1 // loop_footer_branch
      %9 = sbr.rel target = $region3
    $region8: #{graph_attention_layer.1} parent=1 // loop_exit
      _

</llo_original>
